<compile_context>
chip_gen: v7x
topology: tpu7x:2x2x1
jax: 0.10.0
libtpu: 0.0.40
codegen_flags: <defaults>
</compile_context>

<pallas_src>
import jax
import jax.numpy as jnp
from jax.experimental import pallas as pl
from jax.experimental.pallas import tpu as pltpu

MIN_VALUE = -5.0   # torch module's min_value
MAX_VALUE = -2.0   # torch module's max_value


def conv1x1_sq_clamp_kernel(x_ref, w_ref, b_ref, o_ref):
    # x_ref: (N, C_in, Hp, Wp)     VMEM  — input already zero-padded (padding=1)
    # w_ref: (C_out * C_in,)       SMEM  — conv weights as scalars (flat)
    # b_ref: (C_out,)              SMEM  — conv bias as scalars
    # o_ref: (N, C_out, Hp, Wp)    VMEM  — output (same spatial extent as x_ref)
    N, C_in, Hp, Wp = x_ref.shape
    C_out = o_ref.shape[1]

    for n in range(N):                       # static, N == 1
        # Hoist the input tile load: one vld reused for every output channel.
        xv = x_ref[n, 0]                     # (Hp, Wp)

        for oc in range(C_out):              # static, C_out == 2
            # 1x1 conv == per-pixel channel mix on the VPU (no MXU, no zeros-init).
            v = w_ref[oc * C_in] * xv
            for ic in range(1, C_in):        # C_in == 1 -> loop is empty
                v = v + w_ref[oc * C_in + ic] * x_ref[n, ic]
            v = v + b_ref[oc]

            # v2 = mul(v1, v1); v3 = clamp(v2, min, max) == min(max(v2, min), max)
            v = v * v
            v = jnp.minimum(jnp.maximum(v, MIN_VALUE), MAX_VALUE)

            # Single aligned full-tile store per channel (no offset / border overwrite).
            o_ref[n, oc] = v


@jax.jit
def model_forward(x, weight, bias):
    """x: (N, C_in, H, W) float32 NCHW; weight: (C_out, C_in, 1, 1); bias: (C_out,)."""
    N, C_in, H, W = x.shape
    C_out = weight.shape[0]
    Hp, Wp = H + 2, W + 2                    # padding=1, kernel 1x1, stride 1

    # Padding fuses into the surrounding XLA graph; the kernel then needs only
    # aligned full-tile stores (padded pixels are 0 -> border = clamp(b^2)).
    x_pad = jnp.pad(x.astype(jnp.float32), ((0, 0), (0, 0), (1, 1), (1, 1)))
    w_flat = weight.reshape(C_out * C_in).astype(jnp.float32)
    b1 = bias.reshape(C_out).astype(jnp.float32)

    out = pl.pallas_call(
        conv1x1_sq_clamp_kernel,
        out_shape=jax.ShapeDtypeStruct((N, C_out, Hp, Wp), jnp.float32),
        in_specs=[
            pl.BlockSpec(memory_space=pltpu.MemorySpace.VMEM),   # x (padded)
            pl.BlockSpec(memory_space=pltpu.MemorySpace.SMEM),   # weight scalars (1D)
            pl.BlockSpec(memory_space=pltpu.MemorySpace.SMEM),   # bias scalars
        ],
        out_specs=pl.BlockSpec(memory_space=pltpu.MemorySpace.VMEM),
        cost_estimate=pl.CostEstimate(
            flops=5 * N * C_out * Hp * Wp,               # mul, add, mul, min, max per pixel
            transcendentals=0,
            bytes_accessed=4 * (N * C_in * Hp * Wp       # input read
                                + C_out * C_in + C_out   # params
                                + N * C_out * Hp * Wp),  # output write
        ),
    )(x_pad, w_flat, b1)
    return out


if __name__ == "__main__":
    key = jax.random.PRNGKey(0)
    kx, kw, kb = jax.random.split(key, 3)

    # Input shape matches the PyTorch script: x1 = torch.randn(1, 1, 22, 49)
    x1 = jax.random.normal(kx, (1, 1, 22, 49), dtype=jnp.float32)

    # Deterministic parameter init for Conv2d(1, 2, 1): weight (2,1,1,1), bias (2,)
    weight = jax.random.normal(kw, (2, 1, 1, 1), dtype=jnp.float32) * 0.5
    bias = jax.random.normal(kb, (2,), dtype=jnp.float32) * 0.1

    out = model_forward(x1, weight, bias)
    jax.block_until_ready(out)

    # Reference in plain JAX for sanity.
    xp = jnp.pad(x1, ((0, 0), (0, 0), (1, 1), (1, 1)))
    v1 = jnp.einsum("oc,ncHW->noHW", weight.reshape(2, 1), xp) + bias[None, :, None, None]
    ref = jnp.minimum(jnp.maximum(v1 * v1, MIN_VALUE), MAX_VALUE)

    assert out.shape == (1, 2, 24, 51), out.shape
    assert jnp.allclose(out, ref, atol=1e-5, rtol=1e-5)
    print("KERNEL_OK")
</pallas_src>

<mosaic_0001>
module attributes {stable_mosaic.version = 11 : i64} {
  func.func @conv1x1_sq_clamp_kernel(%arg0: memref<1x1x24x51xf32, #tpu.memory_space<vmem>>, %arg1: memref<2xf32, #tpu.memory_space<smem>>, %arg2: memref<2xf32, #tpu.memory_space<smem>>, %arg3: memref<1x2x24x51xf32, #tpu.memory_space<vmem>>) attributes {dimension_semantics = [], scalar_prefetch = 0 : i64, scratch_operands = 0 : i64, tpu.core_type = #tpu.core_type<tc>} {
    %c0 = arith.constant 0 : index
    %c0_0 = arith.constant 0 : index
    %c0_1 = arith.constant 0 : index
    %c0_2 = arith.constant 0 : index
    %0 = vector.load %arg0[%c0, %c0_0, %c0_1, %c0_2] : memref<1x1x24x51xf32, #tpu.memory_space<vmem>>, vector<1x1x24x51xf32>
    %1 = vector.shape_cast %0 : vector<1x1x24x51xf32> to vector<24x51xf32>
    %c0_3 = arith.constant 0 : index
    %2 = memref.load %arg1[%c0_3] : memref<2xf32, #tpu.memory_space<smem>>
    %3 = vector.broadcast %2 : f32 to vector<24x51xf32>
    %4 = arith.mulf %3, %1 : vector<24x51xf32>
    %c0_4 = arith.constant 0 : index
    %5 = memref.load %arg2[%c0_4] : memref<2xf32, #tpu.memory_space<smem>>
    %6 = vector.broadcast %5 : f32 to vector<24x51xf32>
    %7 = arith.addf %4, %6 : vector<24x51xf32>
    %8 = arith.mulf %7, %7 : vector<24x51xf32>
    %cst = arith.constant -5.000000e+00 : f32
    %9 = vector.broadcast %cst : f32 to vector<24x51xf32>
    %10 = arith.maximumf %8, %9 : vector<24x51xf32>
    %cst_5 = arith.constant -2.000000e+00 : f32
    %11 = vector.broadcast %cst_5 : f32 to vector<24x51xf32>
    %12 = arith.minimumf %10, %11 : vector<24x51xf32>
    %c0_6 = arith.constant 0 : index
    %c0_7 = arith.constant 0 : index
    %c0_8 = arith.constant 0 : index
    %c0_9 = arith.constant 0 : index
    %13 = vector.load %arg3[%c0_6, %c0_7, %c0_8, %c0_9] : memref<1x2x24x51xf32, #tpu.memory_space<vmem>>, vector<1x1x24x51xf32>
    %14 = vector.shape_cast %13 : vector<1x1x24x51xf32> to vector<24x51xf32>
    %15 = vector.shape_cast %12 : vector<24x51xf32> to vector<1x1x24x51xf32>
    tpu.vector_store %arg3[%c0_6, %c0_7, %c0_8, %c0_9], %15 {strides = array<i32>} : memref<1x2x24x51xf32, #tpu.memory_space<vmem>>, vector<1x1x24x51xf32>,
    %c1 = arith.constant 1 : index
    %16 = memref.load %arg1[%c1] : memref<2xf32, #tpu.memory_space<smem>>
    %17 = vector.broadcast %16 : f32 to vector<24x51xf32>
    %18 = arith.mulf %17, %1 : vector<24x51xf32>
    %c1_10 = arith.constant 1 : index
    %19 = memref.load %arg2[%c1_10] : memref<2xf32, #tpu.memory_space<smem>>
    %20 = vector.broadcast %19 : f32 to vector<24x51xf32>
    %21 = arith.addf %18, %20 : vector<24x51xf32>
    %22 = arith.mulf %21, %21 : vector<24x51xf32>
    %cst_11 = arith.constant -5.000000e+00 : f32
    %23 = vector.broadcast %cst_11 : f32 to vector<24x51xf32>
    %24 = arith.maximumf %22, %23 : vector<24x51xf32>
    %cst_12 = arith.constant -2.000000e+00 : f32
    %25 = vector.broadcast %cst_12 : f32 to vector<24x51xf32>
    %26 = arith.minimumf %24, %25 : vector<24x51xf32>
    %c0_13 = arith.constant 0 : index
    %c1_14 = arith.constant 1 : index
    %c0_15 = arith.constant 0 : index
    %c0_16 = arith.constant 0 : index
    %27 = vector.load %arg3[%c0_13, %c1_14, %c0_15, %c0_16] : memref<1x2x24x51xf32, #tpu.memory_space<vmem>>, vector<1x1x24x51xf32>
    %28 = vector.shape_cast %27 : vector<1x1x24x51xf32> to vector<24x51xf32>
    %29 = vector.shape_cast %26 : vector<24x51xf32> to vector<1x1x24x51xf32>
    tpu.vector_store %arg3[%c0_13, %c1_14, %c0_15, %c0_16], %29 {strides = array<i32>} : memref<1x2x24x51xf32, #tpu.memory_space<vmem>>, vector<1x1x24x51xf32>,
    return
  }
}

</mosaic_0001>

<llo_original>
// kernel: model_forward.1
$region0: #{model_forward.1}
  #allocation0 [shape = 'u32[]', space=smem, size = 0x4, offset = 0x4, fixed_abs, tag = 'smem constant byte address 0x4 - core index']
  #allocation1 [shape = 'u32[144,128]{1,0:T(1,128)}', space=vmem, size = 0x12000, scoped, tag = 'internal scratch']
  %s0 = inlined_call_operand.vmem [shape: f32[1,1,24,51], index: 0, kind: input, shape index: {}]
  %s1 = inlined_call_operand.vmem [shape: f32[2], index: 1, kind: input, shape index: {}]
  %s2 = inlined_call_operand.vmem [shape: f32[2], index: 2, kind: input, shape index: {}]
  %s3 = inlined_call_operand.hbm [shape: f32[1,2,24,51], index: 3, kind: output, shape index: {}]
  %s4 = sld [smem:[#allocation0]]
  $region30: #{model_forward.1} parent=0
    _
  %s6 = ssub.s32 1, %s4
  %s7 = scalar_select 0, %s6, %s4
  $region1: #{model_forward.1} parent=0
    #allocation2 [shape = 'u8[512]{0}', space=smem, size = 0x200, scoped, tag = 'input window, operand 1, single buffered']
    #allocation3 [shape = 's32[1]{0}', space=sflag, size = 0x4, scoped, tag = 'scoped memory for model_forward.1']
    #allocation4 [shape = 's32[1]{0}', space=sflag, size = 0x4, scoped, tag = 'scoped memory for model_forward.1']
    #allocation5 [shape = 'u8[512]{0}', space=smem, size = 0x200, scoped, tag = 'input window, operand 2, single buffered']
    #allocation6 [shape = 's32[1]{0}', space=sflag, size = 0x4, scoped, tag = 'scoped memory for model_forward.1']
    #allocation7 [shape = 'u8[24576]{0}', space=vmem, size = 0x6000, scoped, tag = 'output window, operand 0, single buffered']
    %8 = vsyncpa [#allocation4], 0
    %9 = vsyncpa [#allocation6], 0
    %10 = vsyncpa [#allocation3], 0
    // Predicated region
    $region2: #{model_forward.1} parent=1 // pred_check
      _
    $region3: #{model_forward.1} parent=1 // pred_check_branch
      %12 = sbr.rel (0) target = $region5
    $region4: #{model_forward.1} parent=1 // pred_region
      _
    $region5: #{model_forward.1} parent=1 // pred_fallthru
      _
    // Predicated region
    $region6: #{model_forward.1} parent=1 // pred_check
      _
    $region7: #{model_forward.1} parent=1 // pred_check_branch
      %14 = sbr.rel (0) target = $region9
    $region8: #{model_forward.1} parent=1 // pred_region
      %s16 = ssub.s32 16, 16
      %17 = vsyncadd [#allocation4], %s16
      %s19 = sshll.u32 %s1, 4
      %s20 = int_to_ptr.vmem [resolvable:$true] %s19
      %22 = dma.vmem_to_smem %s20, 16, [#allocation2], [#allocation4]
    $region9: #{model_forward.1} parent=1 // pred_fallthru
      _
    // Predicated region
    $region10: #{model_forward.1} parent=1 // pred_check
      _
    $region11: #{model_forward.1} parent=1 // pred_check_branch
      %24 = sbr.rel (0) target = $region13
    $region12: #{model_forward.1} parent=1 // pred_region
      %s26 = ssub.s32 16, 16
      %27 = vsyncadd [#allocation6], %s26
      %s29 = sshll.u32 %s2, 4
      %s30 = int_to_ptr.vmem [resolvable:$true] %s29
      %32 = dma.vmem_to_smem %s30, 16, [#allocation5], [#allocation6]
    $region13: #{model_forward.1} parent=1 // pred_fallthru
      _
    // Predicated region
    $region14: #{model_forward.1} parent=1 // pred_check
      _
    $region15: #{model_forward.1} parent=1 // pred_check_branch
      %34 = sbr.rel (0) target = $region17
    $region16: #{model_forward.1} parent=1 // pred_region
      %35 = dma.done [#allocation4], 16
    $region17: #{model_forward.1} parent=1 // pred_fallthru
      _
    // Predicated region
    $region18: #{model_forward.1} parent=1 // pred_check
      _
    $region19: #{model_forward.1} parent=1 // pred_check_branch
      %37 = sbr.rel (0) target = $region21
    $region20: #{model_forward.1} parent=1 // pred_region
      %38 = dma.done [#allocation6], 16
    $region21: #{model_forward.1} parent=1 // pred_fallthru
      _
    %39 = sfence
    %v40 = vld [vmem:[%s0] sm:$0xff]
    %v41 = vld [vmem:[%s0 + $0x8] sm:$0xff]
    %v42 = vld [vmem:[%s0 + $0x10] sm:$0xff]
    %s43 = sld [smem:[#allocation2]]
    %v44 = vstv %s43
    %v45 = vmul.f32 %v44, %v40
    %v46 = vmul.f32 %v44, %v41
    %v47 = vmul.f32 %v44, %v42
    %s48 = sld [smem:[#allocation5]]
    %v49 = vstv %s48
    %v50 = vadd.f32 %v45, %v49
    %v51 = vadd.f32 %v46, %v49
    %v52 = vadd.f32 %v47, %v49
    %v53 = vmul.f32 %v50, %v50
    %v54 = vmul.f32 %v51, %v51
    %v55 = vmul.f32 %v52, %v52
    %v56 = vmax.f32 %v53, -5.0
    %v57 = vmax.f32 %v54, -5.0
    %v58 = vmax.f32 %v55, -5.0
    %v59 = vmin.f32 %v56, -2.0
    %v60 = vmin.f32 %v57, -2.0
    %v61 = vmin.f32 %v58, -2.0
    %vm62 = vcmask 416768
    %63 = vst.msk [vmem:[#allocation7] sm:$0xff] %vm62, %v59
    %64 = vst.msk [vmem:[#allocation7 + $0x8] sm:$0xff] %vm62, %v60
    %65 = vst.msk [vmem:[#allocation7 + $0x10] sm:$0xff] %vm62, %v61
    %s66 = sld [smem:[#allocation2 + $0x1]]
    %v67 = vstv %s66
    %v68 = vmul.f32 %v67, %v40
    %v69 = vmul.f32 %v67, %v41
    %v70 = vmul.f32 %v67, %v42
    %s71 = sld [smem:[#allocation5 + $0x1]]
    %v72 = vstv %s71
    %v73 = vadd.f32 %v68, %v72
    %v74 = vadd.f32 %v69, %v72
    %v75 = vadd.f32 %v70, %v72
    %v76 = vmul.f32 %v73, %v73
    %v77 = vmul.f32 %v74, %v74
    %v78 = vmul.f32 %v75, %v75
    %v79 = vmax.f32 %v76, -5.0
    %v80 = vmax.f32 %v77, -5.0
    %v81 = vmax.f32 %v78, -5.0
    %v82 = vmin.f32 %v79, -2.0
    %v83 = vmin.f32 %v80, -2.0
    %v84 = vmin.f32 %v81, -2.0
    %s85 = scalar_lea.vmem [#allocation7], 24
    %86 = vst.msk [vmem:[%s85] sm:$0xff] %vm62, %v82
    %87 = vst.msk [vmem:[%s85 + $0x8] sm:$0xff] %vm62, %v83
    %88 = vst.msk [vmem:[%s85 + $0x10] sm:$0xff] %vm62, %v84
    // Predicated region
    $region22: #{model_forward.1} parent=1 // pred_check
      _
    $region23: #{model_forward.1} parent=1 // pred_check_branch
      %90 = sbr.rel (0) target = $region25
    $region24: #{model_forward.1} parent=1 // pred_region
      %s92 = ssub.s32 768, 768
      %93 = vsyncadd [#allocation3], %s92
      %s94 = sshll.u32 [#allocation7], 4
      %s95 = int_to_ptr.vmem [resolvable:$true] %s94
      %100 = dma.vmem_to_hbm [thread:$0]  %s95, 768, %s3, [#allocation3], 128, 128, 8
    $region25: #{model_forward.1} parent=1 // pred_fallthru
      _
    // Predicated region
    $region26: #{model_forward.1} parent=1 // pred_check
      _
    $region27: #{model_forward.1} parent=1 // pred_check_branch
      %102 = sbr.rel (0) target = $region29
    $region28: #{model_forward.1} parent=1 // pred_region
      %103 = dma.done [#allocation3], 768
    $region29: #{model_forward.1} parent=1 // pred_fallthru
      _
    %104 = vsyncpa [#allocation3], 1
    %105 = vsyncpa [#allocation4], 1
    %106 = vsyncpa [#allocation6], 1

</llo_original>
